<compile_context>
chip_gen: v7x
topology: tpu7x:2x2x1
jax: 0.10.0
libtpu: 0.0.40
codegen_flags: <defaults>
</compile_context>

<pallas_src>
import jax
import jax.numpy as jnp
from jax.experimental import pallas as pl
from jax.experimental.pallas import tpu as pltpu

H1 = 512
H2 = 256

_VMEM_BUDGET = 40 * 1024 * 1024   # target working-set bound (v7x-safe)
_VMEM_LIMIT = 48 * 1024 * 1024    # scoped VMEM limit handed to Mosaic


def _round_up(x, m):
    return (x + m - 1) // m * m


def _choose_tm(batch, spec_dim, param_dim, tm_cap):
    """Pick the batch tile so the working set fits VMEM, each grid step moves
    ~1 MiB of activations, and (when possible) the grid has >= 2 steps."""
    total = spec_dim + param_dim
    # Resident (single-buffered) weights: bf16 w1a/w1b/w2 + f32 biases/w3.
    resident = 2 * H1 * total + 2 * H1 * H2 + 4 * (H1 + 2 * H2 + 1)
    # Per batch-row cost: double-buffered bf16 activation tiles + f32
    # intermediates (h1 f32 + bf16 copy, h2 f32) + double-buffered f32 output.
    per_row = 2 * 2 * total + (6 * H1 + 4 * H2) + 2 * 4
    tm_budget = max(8, ((_VMEM_BUDGET - resident) // per_row) // 8 * 8)
    # ~1 MiB of bf16 activations per grid step (measured sweet spot), cap 1024.
    tm_traffic = min(1024, _round_up(max(1, (1 << 20) // max(2 * total, 1)), 8))
    tm = min(tm_cap, tm_budget, tm_traffic)
    # >= 2 grid steps so ("parallel",) can use both v7x TensorCores.
    tm = min(tm, _round_up(pl.cdiv(batch, 2), 8))
    return max(8, tm)


def _disc_kernel(spec_ref, prm_ref, w1a_ref, w1b_ref, b1_ref,
                 w2_ref, b2_ref, w3_ref, b3_ref, o_ref):
    # ---- Layer 1: Linear(total, 512) + LeakyReLU(0.2) -------------------
    # concat(spec, params) @ w1 == spec @ w1[:spec_dim] + params @ w1[spec_dim:]
    h1 = jnp.dot(spec_ref[...], w1a_ref[...], preferred_element_type=jnp.float32)
    h1 = h1 + jnp.dot(prm_ref[...], w1b_ref[...], preferred_element_type=jnp.float32)
    h1 = h1 + b1_ref[...]                         # (TM, 512) f32
    h1 = jnp.maximum(h1, 0.2 * h1)                # LeakyReLU, mul+max

    # ---- Layer 2: Linear(512, 256) + LeakyReLU(0.2) ----------------------
    h2 = jnp.dot(h1.astype(jnp.bfloat16), w2_ref[...],
                 preferred_element_type=jnp.float32)
    h2 = h2 + b2_ref[...]                         # (TM, 256) f32
    h2 = jnp.maximum(h2, 0.2 * h2)

    # ---- Layer 3: Linear(256, 1) + Sigmoid -------------------------------
    # N=1 matmul would waste the MXU; VPU multiply + lane reduction instead.
    z = jnp.sum(h2 * w3_ref[...], axis=-1, keepdims=True) + b3_ref[0, 0]
    o_ref[...] = jax.nn.sigmoid(z).astype(o_ref.dtype)


def discriminator_forward(spectrum, params, weights, *, tm=1024):
    """Pallas equivalent of Discriminator.forward.

    spectrum: (B, ...) -> flattened to (B, spec_dim)   (ideally already bf16)
    params:   (B, ...) -> flattened to (B, param_dim)  (ideally already bf16)
    weights:  dict with
        w1a (spec_dim, 512) bf16, w1b (param_dim, 512) bf16, b1 (1, 512) f32,
        w2  (512, 256)      bf16, b2 (1, 256) f32,
        w3  (1, 256)        f32,  b3 (1, 1)   f32
    returns:  (B, 1) float32 in (0, 1)
    """
    B = spectrum.shape[0]
    spectrum = spectrum.reshape(B, -1)
    params = params.reshape(B, -1)
    # Stream activations in bf16 (cast is a no-op if upstream already bf16).
    if spectrum.dtype != jnp.bfloat16:
        spectrum = spectrum.astype(jnp.bfloat16)
    if params.dtype != jnp.bfloat16:
        params = params.astype(jnp.bfloat16)
    spec_dim = spectrum.shape[1]
    param_dim = params.shape[1]
    total = spec_dim + param_dim

    TM = _choose_tm(B, spec_dim, param_dim, tm)
    grid = (pl.cdiv(B, TM),)   # no host-side pad; ragged final block is fine

    weight_bytes = (2 * (spec_dim * H1 + param_dim * H1 + H1 * H2)
                    + 4 * (H1 + H2 + H2 + 1))
    cost = pl.CostEstimate(
        flops=2 * B * (total * H1 + H1 * H2 + H2),
        transcendentals=B,
        bytes_accessed=B * total * 2 + B * 4 + weight_bytes,
    )

    resident = pl.Buffered(1)   # constant-index blocks: no second buffer

    out = pl.pallas_call(
        _disc_kernel,
        out_shape=jax.ShapeDtypeStruct((B, 1), jnp.float32),
        grid=grid,
        in_specs=[
            pl.BlockSpec((TM, spec_dim), lambda i: (i, 0)),      # spectrum tile
            pl.BlockSpec((TM, param_dim), lambda i: (i, 0)),     # params tile
            pl.BlockSpec((spec_dim, H1), lambda i: (0, 0),
                         pipeline_mode=resident),                # w1a
            pl.BlockSpec((param_dim, H1), lambda i: (0, 0),
                         pipeline_mode=resident),                # w1b
            pl.BlockSpec((1, H1), lambda i: (0, 0),
                         pipeline_mode=resident),                # b1
            pl.BlockSpec((H1, H2), lambda i: (0, 0),
                         pipeline_mode=resident),                # w2
            pl.BlockSpec((1, H2), lambda i: (0, 0),
                         pipeline_mode=resident),                # b2
            pl.BlockSpec((1, H2), lambda i: (0, 0),
                         pipeline_mode=resident),                # w3 row
            pl.BlockSpec(memory_space=pltpu.MemorySpace.SMEM),   # b3 scalar
        ],
        out_specs=pl.BlockSpec((TM, 1), lambda i: (i, 0)),
        compiler_params=pltpu.CompilerParams(
            dimension_semantics=("parallel",),
            vmem_limit_bytes=_VMEM_LIMIT),
        cost_estimate=cost,
    )(
        spectrum, params,
        weights["w1a"], weights["w1b"], weights["b1"],
        weights["w2"], weights["b2"],
        weights["w3"], weights["b3"],
    )
    return out


def init_discriminator_params(key, input_spec_dim, input_param_dim):
    """Deterministic synthetic init mirroring nn.Linear shapes.

    PyTorch stores Linear weights as (out, in); here w1 is stored pre-split and
    transposed as (in, out) bf16 blocks so the kernel computes x @ W directly
    without a host-side concat or transpose.
    """
    total = input_spec_dim + input_param_dim
    k1, k2, k3 = jax.random.split(key, 3)

    def uniform(k, shape, fan_in):
        bound = 1.0 / jnp.sqrt(fan_in)
        return jax.random.uniform(k, shape, jnp.float32, -bound, bound)

    w1 = uniform(k1, (total, H1), total)
    return {
        "w1a": w1[:input_spec_dim].astype(jnp.bfloat16),
        "w1b": w1[input_spec_dim:].astype(jnp.bfloat16),
        "b1": uniform(jax.random.fold_in(k1, 1), (1, H1), total),
        "w2": uniform(k2, (H1, H2), H1).astype(jnp.bfloat16),
        "b2": uniform(jax.random.fold_in(k2, 1), (1, H2), H1),
        "w3": uniform(k3, (1, H2), H2),          # (256, 1) stored as (1, 256)
        "b3": uniform(jax.random.fold_in(k3, 1), (1, 1), H2),
    }


def _reference_forward(spectrum, params, weights):
    """Pure-JAX f32 reference (same bf16-stored weights/inputs, f32 math)."""
    B = spectrum.shape[0]
    x = jnp.concatenate(
        [spectrum.reshape(B, -1), params.reshape(B, -1)], axis=1
    ).astype(jnp.float32)
    w1 = jnp.concatenate(
        [weights["w1a"].astype(jnp.float32), weights["w1b"].astype(jnp.float32)],
        axis=0)
    h1 = x @ w1 + weights["b1"]
    h1 = jnp.where(h1 > 0, h1, 0.2 * h1)
    h2 = h1 @ weights["w2"].astype(jnp.float32) + weights["b2"]
    h2 = jnp.where(h2 > 0, h2, 0.2 * h2)
    z = h2 @ weights["w3"].T + weights["b3"]
    return jax.nn.sigmoid(z)


if __name__ == "__main__":
    key = jax.random.PRNGKey(0)
    k_spec, k_param, k_w = jax.random.split(key, 3)

    batch = 2
    input_spec_dim = 32
    input_param_dim = 8

    spectrum = jax.random.normal(
        k_spec, (batch, input_spec_dim), jnp.float32).astype(jnp.bfloat16)
    params = jax.random.normal(
        k_param, (batch, input_param_dim), jnp.float32).astype(jnp.bfloat16)
    weights = init_discriminator_params(k_w, input_spec_dim, input_param_dim)

    out = discriminator_forward(spectrum, params, weights)
    out = jax.block_until_ready(out)

    ref = _reference_forward(spectrum, params, weights)
    assert out.shape == (batch, 1), out.shape
    # bf16 MXU inputs/weights vs f32 reference -> loose-but-tight-enough tol.
    assert jnp.allclose(out, ref, atol=2e-2, rtol=2e-2), (out, ref)

    print("KERNEL_OK")
</pallas_src>

<mosaic_0001>
module attributes {stable_mosaic.version = 11 : i64} {
  func.func @_disc_kernel(%arg0: i32, %arg1: memref<8x32xbf16, #tpu.memory_space<vmem>>, %arg2: memref<8x8xbf16, #tpu.memory_space<vmem>>, %arg3: memref<32x512xbf16, #tpu.memory_space<vmem>>, %arg4: memref<8x512xbf16, #tpu.memory_space<vmem>>, %arg5: memref<1x512xf32, #tpu.memory_space<vmem>>, %arg6: memref<512x256xbf16, #tpu.memory_space<vmem>>, %arg7: memref<1x256xf32, #tpu.memory_space<vmem>>, %arg8: memref<1x256xf32, #tpu.memory_space<vmem>>, %arg9: memref<1x1xf32, #tpu.memory_space<smem>>, %arg10: memref<8x1xf32, #tpu.memory_space<vmem>>) attributes {dimension_semantics = [#tpu.dimension_semantics<parallel>], iteration_bounds = array<i64: 1>, scalar_prefetch = 0 : i64, scratch_operands = 0 : i64, tpu.core_type = #tpu.core_type<tc>, window_params = [{transform_indices = @transform_0, window_bounds = array<i64: 8, 32>}, {transform_indices = @transform_1, window_bounds = array<i64: 8, 8>}, {pipeline_mode = #tpu.pipeline_mode<synchronous>, transform_indices = @transform_2, window_bounds = array<i64: 32, 512>}, {pipeline_mode = #tpu.pipeline_mode<synchronous>, transform_indices = @transform_3, window_bounds = array<i64: 8, 512>}, {pipeline_mode = #tpu.pipeline_mode<synchronous>, transform_indices = @transform_4, window_bounds = array<i64: 1, 512>}, {pipeline_mode = #tpu.pipeline_mode<synchronous>, transform_indices = @transform_5, window_bounds = array<i64: 512, 256>}, {pipeline_mode = #tpu.pipeline_mode<synchronous>, transform_indices = @transform_6, window_bounds = array<i64: 1, 256>}, {pipeline_mode = #tpu.pipeline_mode<synchronous>, transform_indices = @transform_7, window_bounds = array<i64: 1, 256>}, {transform_indices = @transform_8, window_bounds = array<i64: 1, 1>}, {transform_indices = @transform_9, window_bounds = array<i64: 8, 1>}]} {
    %c0 = arith.constant 0 : index
    %c0_0 = arith.constant 0 : index
    %0 = vector.load %arg1[%c0, %c0_0] : memref<8x32xbf16, #tpu.memory_space<vmem>>, vector<8x32xbf16>
    %c0_1 = arith.constant 0 : index
    %c0_2 = arith.constant 0 : index
    %1 = vector.load %arg3[%c0_1, %c0_2] : memref<32x512xbf16, #tpu.memory_space<vmem>>, vector<32x512xbf16>
    %cst = arith.constant dense<0.000000e+00> : vector<8x512xf32>
    %2 = tpu.matmul %0, %1, %cst {dimension_numbers = #tpu.dot_dimension_numbers<[1], [0], [0], [1], [0, 0, 1, 1], [], []>} : vector<8x32xbf16>, vector<32x512xbf16>, vector<8x512xf32> -> vector<8x512xf32>
    %c0_3 = arith.constant 0 : index
    %c0_4 = arith.constant 0 : index
    %3 = vector.load %arg2[%c0_3, %c0_4] : memref<8x8xbf16, #tpu.memory_space<vmem>>, vector<8x8xbf16>
    %c0_5 = arith.constant 0 : index
    %c0_6 = arith.constant 0 : index
    %4 = vector.load %arg4[%c0_5, %c0_6] : memref<8x512xbf16, #tpu.memory_space<vmem>>, vector<8x512xbf16>
    %cst_7 = arith.constant dense<0.000000e+00> : vector<8x512xf32>
    %5 = tpu.matmul %3, %4, %cst_7 {dimension_numbers = #tpu.dot_dimension_numbers<[1], [0], [0], [1], [0, 0, 1, 1], [], []>} : vector<8x8xbf16>, vector<8x512xbf16>, vector<8x512xf32> -> vector<8x512xf32>
    %6 = arith.addf %2, %5 : vector<8x512xf32>
    %c0_8 = arith.constant 0 : index
    %c0_9 = arith.constant 0 : index
    %7 = vector.load %arg5[%c0_8, %c0_9] : memref<1x512xf32, #tpu.memory_space<vmem>>, vector<1x512xf32>
    %8 = vector.broadcast %7 : vector<1x512xf32> to vector<8x512xf32>
    %9 = arith.addf %6, %8 : vector<8x512xf32>
    %cst_10 = arith.constant 2.000000e-01 : f32
    %10 = vector.broadcast %cst_10 : f32 to vector<8x512xf32>
    %11 = arith.mulf %10, %9 : vector<8x512xf32>
    %12 = arith.maximumf %9, %11 : vector<8x512xf32>
    %13 = arith.truncf %12 : vector<8x512xf32> to vector<8x512xbf16>
    %c0_11 = arith.constant 0 : index
    %c0_12 = arith.constant 0 : index
    %14 = vector.load %arg6[%c0_11, %c0_12] : memref<512x256xbf16, #tpu.memory_space<vmem>>, vector<512x256xbf16>
    %cst_13 = arith.constant dense<0.000000e+00> : vector<8x256xf32>
    %15 = tpu.matmul %13, %14, %cst_13 {dimension_numbers = #tpu.dot_dimension_numbers<[1], [0], [0], [1], [0, 0, 1, 1], [], []>} : vector<8x512xbf16>, vector<512x256xbf16>, vector<8x256xf32> -> vector<8x256xf32>
    %c0_14 = arith.constant 0 : index
    %c0_15 = arith.constant 0 : index
    %16 = vector.load %arg7[%c0_14, %c0_15] : memref<1x256xf32, #tpu.memory_space<vmem>>, vector<1x256xf32>
    %17 = vector.broadcast %16 : vector<1x256xf32> to vector<8x256xf32>
    %18 = arith.addf %15, %17 : vector<8x256xf32>
    %cst_16 = arith.constant 2.000000e-01 : f32
    %19 = vector.broadcast %cst_16 : f32 to vector<8x256xf32>
    %20 = arith.mulf %19, %18 : vector<8x256xf32>
    %21 = arith.maximumf %18, %20 : vector<8x256xf32>
    %c0_17 = arith.constant 0 : index
    %c0_18 = arith.constant 0 : index
    %22 = vector.load %arg8[%c0_17, %c0_18] : memref<1x256xf32, #tpu.memory_space<vmem>>, vector<1x256xf32>
    %23 = vector.broadcast %22 : vector<1x256xf32> to vector<8x256xf32>
    %24 = arith.mulf %21, %23 : vector<8x256xf32>
    %cst_19 = arith.constant dense<0.000000e+00> : vector<8xf32>
    %25 = vector.multi_reduction <add>, %24, %cst_19 [1] : vector<8x256xf32> to vector<8xf32>
    %26 = vector.shape_cast %25 : vector<8xf32> to vector<8x1xf32>
    %c0_20 = arith.constant 0 : index
    %c0_21 = arith.constant 0 : index
    %27 = memref.load %arg9[%c0_20, %c0_21] : memref<1x1xf32, #tpu.memory_space<smem>>
    %28 = vector.broadcast %27 : f32 to vector<8x1xf32>
    %29 = arith.addf %26, %28 : vector<8x1xf32>
    %30 = arith.negf %29 : vector<8x1xf32>
    %31 = math.exp %30 : vector<8x1xf32>
    %cst_22 = arith.constant 1.000000e+00 : f32
    %32 = vector.broadcast %cst_22 : f32 to vector<8x1xf32>
    %33 = arith.addf %32, %31 : vector<8x1xf32>
    %34 = arith.divf %32, %33 : vector<8x1xf32>
    %c0_23 = arith.constant 0 : index
    %c0_24 = arith.constant 0 : index
    %35 = vector.load %arg10[%c0_23, %c0_24] : memref<8x1xf32, #tpu.memory_space<vmem>>, vector<8x1xf32>
    tpu.vector_store %arg10[%c0_23, %c0_24], %34 {strides = array<i32>} : memref<8x1xf32, #tpu.memory_space<vmem>>, vector<8x1xf32>,
    return
  }
  func.func @transform_0(%arg0: i32) -> (i32, i32) {
    %c0_i32 = arith.constant 0 : i32
    %c0_i32_0 = arith.constant 0 : i32
    return %arg0, %c0_i32 : i32, i32
  }
  func.func @transform_1(%arg0: i32) -> (i32, i32) {
    %c0_i32 = arith.constant 0 : i32
    %c0_i32_0 = arith.constant 0 : i32
    return %arg0, %c0_i32 : i32, i32
  }
  func.func @transform_2(%arg0: i32) -> (i32, i32) {
    %c0_i32 = arith.constant 0 : i32
    %c0_i32_0 = arith.constant 0 : i32
    %c0_i32_1 = arith.constant 0 : i32
    return %c0_i32, %c0_i32_0 : i32, i32
  }
  func.func @transform_3(%arg0: i32) -> (i32, i32) {
    %c0_i32 = arith.constant 0 : i32
    %c0_i32_0 = arith.constant 0 : i32
    %c0_i32_1 = arith.constant 0 : i32
    return %c0_i32, %c0_i32_0 : i32, i32
  }
  func.func @transform_4(%arg0: i32) -> (i32, i32) {
    %c0_i32 = arith.constant 0 : i32
    %c0_i32_0 = arith.constant 0 : i32
    %c0_i32_1 = arith.constant 0 : i32
    return %c0_i32, %c0_i32_0 : i32, i32
  }
  func.func @transform_5(%arg0: i32) -> (i32, i32) {
    %c0_i32 = arith.constant 0 : i32
    %c0_i32_0 = arith.constant 0 : i32
    %c0_i32_1 = arith.constant 0 : i32
    return %c0_i32, %c0_i32_0 : i32, i32
  }
  func.func @transform_6(%arg0: i32) -> (i32, i32) {
    %c0_i32 = arith.constant 0 : i32
    %c0_i32_0 = arith.constant 0 : i32
    %c0_i32_1 = arith.constant 0 : i32
    return %c0_i32, %c0_i32_0 : i32, i32
  }
  func.func @transform_7(%arg0: i32) -> (i32, i32) {
    %c0_i32 = arith.constant 0 : i32
    %c0_i32_0 = arith.constant 0 : i32
    %c0_i32_1 = arith.constant 0 : i32
    return %c0_i32, %c0_i32_0 : i32, i32
  }
  func.func @transform_8(%arg0: i32) -> (i32, i32) {
    %c0_i32 = arith.constant 0 : i32
    %c0_i32_0 = arith.constant 0 : i32
    %c0_i32_1 = arith.constant 0 : i32
    return %c0_i32, %c0_i32_0 : i32, i32
  }
  func.func @transform_9(%arg0: i32) -> (i32, i32) {
    %c0_i32 = arith.constant 0 : i32
    %c0_i32_0 = arith.constant 0 : i32
    return %arg0, %c0_i32 : i32, i32
  }
}

</mosaic_0001>

<llo_original>
// kernel: tpu_custom_call.1
$region0: #{tpu_custom_call.1}
  #allocation0 [shape = 'u32[]', space=smem, size = 0x4, offset = 0x4, fixed_abs, tag = 'smem constant byte address 0x4 - core index']
  #allocation1 [shape = 'u32[144,128]{1,0:T(1,128)}', space=vmem, size = 0x12000, scoped, tag = 'internal scratch']
  #allocation2 [shape = 'f32[1,1]{1,0:T(1,128)S(6)}', space=smem, size = 0x200, scoped, tag = 'scoped memory for tpu_custom_call.1']
  %s0 = inlined_call_operand.vmem [shape: bf16[2,32], index: 0, kind: input, shape index: {}]
  %s1 = inlined_call_operand.hbm [shape: bf16[2,8], index: 1, kind: input, shape index: {}]
  %s2 = inlined_call_operand.hbm [shape: bf16[32,512], index: 2, kind: input, shape index: {}]
  %s3 = inlined_call_operand.hbm [shape: bf16[8,512], index: 3, kind: input, shape index: {}]
  %s4 = inlined_call_operand.vmem [shape: f32[1,512], index: 4, kind: input, shape index: {}]
  %s5 = inlined_call_operand.hbm [shape: bf16[512,256], index: 5, kind: input, shape index: {}]
  %s6 = inlined_call_operand.vmem [shape: f32[1,256], index: 6, kind: input, shape index: {}]
  %s7 = inlined_call_operand.vmem [shape: f32[1,256], index: 7, kind: input, shape index: {}]
  %s8 = inlined_call_operand.<no memory space> [shape: f32[1,1], index: 8, kind: input, shape index: {}]
  %s9 = inlined_call_operand.vmem [shape: f32[2,1], index: 9, kind: output, shape index: {}]
  %s10 = sld [smem:[#allocation0]]
  $region92: #{tpu_custom_call.1} parent=0
    _
  %s12 = ssub.s32 1, %s10
  %s13 = scalar_select 0, %s12, %s10
  %14 = sst [smem:[#allocation2]] %s8
  $region1: #{tpu_custom_call.1} parent=0
    #allocation3 [shape = 'u8[2048]{0}', space=vmem, size = 0x800, scoped, tag = 'input window, operand 1, single buffered']
    #allocation4 [shape = 's32[1]{0}', space=sflag, size = 0x4, scoped, tag = 'scoped memory for tpu_custom_call.1']
    #allocation5 [shape = 'u8[32768]{0}', space=vmem, size = 0x8000, scoped, tag = 'input window, operand 2, single buffered']
    #allocation6 [shape = 's32[1]{0}', space=sflag, size = 0x4, scoped, tag = 'scoped memory for tpu_custom_call.1']
    #allocation7 [shape = 'u8[8192]{0}', space=vmem, size = 0x2000, scoped, tag = 'input window, operand 3, single buffered']
    #allocation8 [shape = 'u8[262144]{0}', space=vmem, size = 0x40000, scoped, tag = 'input window, operand 5, single buffered']
    #allocation9 [shape = 's32[1]{0}', space=sflag, size = 0x4, scoped, tag = 'scoped memory for tpu_custom_call.1']
    #allocation10 [shape = 'u8[4096]{0}', space=vmem, size = 0x1000, scoped, tag = 'output window, operand 0, single buffered']
    %15 = vsyncpa [#allocation4], 0
    %16 = vsyncpa [#allocation6], 0
    %17 = vsyncpa [#allocation9], 0
    // Predicated region
    $region2: #{tpu_custom_call.1} parent=1 // pred_check
      _
    $region3: #{tpu_custom_call.1} parent=1 // pred_check_branch
      %19 = sbr.rel (0) target = $region5
    $region4: #{tpu_custom_call.1} parent=1 // pred_region
      _
    $region5: #{tpu_custom_call.1} parent=1 // pred_fallthru
      _
    // Predicated region
    $region6: #{tpu_custom_call.1} parent=1 // pred_check
      _
    $region7: #{tpu_custom_call.1} parent=1 // pred_check_branch
      %21 = sbr.rel (0) target = $region9
    $region8: #{tpu_custom_call.1} parent=1 // pred_region
      %s23 = ssub.s32 64, 16
      %24 = vsyncadd [#allocation4], %s23
      %s25 = sshll.u32 [#allocation3], 4
      %s26 = int_to_ptr.vmem [resolvable:$true] %s25
      %31 = dma.hbm_to_vmem [thread:$0]  %s1, 16, %s26, [#allocation4], 16, 16, 1
    $region9: #{tpu_custom_call.1} parent=1 // pred_fallthru
      _
    // Predicated region
    $region10: #{tpu_custom_call.1} parent=1 // pred_check
      _
    $region11: #{tpu_custom_call.1} parent=1 // pred_check_branch
      %33 = sbr.rel (0) target = $region13
    $region12: #{tpu_custom_call.1} parent=1 // pred_region
      %s35 = ssub.s32 1024, 1024
      %36 = vsyncadd [#allocation6], %s35
      %s37 = sshll.u32 [#allocation5], 4
      %s38 = int_to_ptr.vmem [resolvable:$true] %s37
      %43 = dma.hbm_to_vmem [thread:$0]  %s2, 1024, %s38, [#allocation6], 256, 256, 16
    $region13: #{tpu_custom_call.1} parent=1 // pred_fallthru
      _
    // Predicated region
    $region14: #{tpu_custom_call.1} parent=1 // pred_check
      _
    $region15: #{tpu_custom_call.1} parent=1 // pred_check_branch
      %45 = sbr.rel (0) target = $region17
    $region16: #{tpu_custom_call.1} parent=1 // pred_region
      %s47 = ssub.s32 256, 256
      %48 = vsyncadd [#allocation6], %s47
      %s50 = sshll.u32 [#allocation7], 4
      %s51 = int_to_ptr.vmem [resolvable:$true] %s50
      %53 = dma.hbm_to_vmem [thread:$0]  %s3, 256, %s51, [#allocation6]
    $region17: #{tpu_custom_call.1} parent=1 // pred_fallthru
      _
    // Predicated region
    $region18: #{tpu_custom_call.1} parent=1 // pred_check
      _
    $region19: #{tpu_custom_call.1} parent=1 // pred_check_branch
      %55 = sbr.rel (0) target = $region21
    $region20: #{tpu_custom_call.1} parent=1 // pred_region
      _
    $region21: #{tpu_custom_call.1} parent=1 // pred_fallthru
      _
    // Predicated region
    $region22: #{tpu_custom_call.1} parent=1 // pred_check
      _
    $region23: #{tpu_custom_call.1} parent=1 // pred_check_branch
      %57 = sbr.rel (0) target = $region25
    $region24: #{tpu_custom_call.1} parent=1 // pred_region
      %s59 = ssub.s32 8192, 8192
      %60 = vsyncadd [#allocation9], %s59
      %s61 = sshll.u32 [#allocation8], 4
      %s62 = int_to_ptr.vmem [resolvable:$true] %s61
      %67 = dma.hbm_to_vmem [thread:$0]  %s5, 8192, %s62, [#allocation9], 128, 128, 8
    $region25: #{tpu_custom_call.1} parent=1 // pred_fallthru
      _
    // Predicated region
    $region26: #{tpu_custom_call.1} parent=1 // pred_check
      _
    $region27: #{tpu_custom_call.1} parent=1 // pred_check_branch
      %69 = sbr.rel (0) target = $region29
    $region28: #{tpu_custom_call.1} parent=1 // pred_region
      _
    $region29: #{tpu_custom_call.1} parent=1 // pred_fallthru
      _
    // Predicated region
    $region30: #{tpu_custom_call.1} parent=1 // pred_check
      _
    $region31: #{tpu_custom_call.1} parent=1 // pred_check_branch
      %71 = sbr.rel (0) target = $region33
    $region32: #{tpu_custom_call.1} parent=1 // pred_region
      _
    $region33: #{tpu_custom_call.1} parent=1 // pred_fallthru
      _
    // Predicated region
    $region34: #{tpu_custom_call.1} parent=1 // pred_check
      _
    $region35: #{tpu_custom_call.1} parent=1 // pred_check_branch
      %73 = sbr.rel (0) target = $region37
    $region36: #{tpu_custom_call.1} parent=1 // pred_region
      _
    $region37: #{tpu_custom_call.1} parent=1 // pred_fallthru
      _
    // Predicated region
    $region38: #{tpu_custom_call.1} parent=1 // pred_check
      _
    $region39: #{tpu_custom_call.1} parent=1 // pred_check_branch
      %75 = sbr.rel (0) target = $region41
    $region40: #{tpu_custom_call.1} parent=1 // pred_region
      %76 = dma.done [#allocation4], 64
    $region41: #{tpu_custom_call.1} parent=1 // pred_fallthru
      _
    // Predicated region
    $region42: #{tpu_custom_call.1} parent=1 // pred_check
      _
    $region43: #{tpu_custom_call.1} parent=1 // pred_check_branch
      %78 = sbr.rel (0) target = $region45
    $region44: #{tpu_custom_call.1} parent=1 // pred_region
      %79 = dma.done [#allocation6], 1024
    $region45: #{tpu_custom_call.1} parent=1 // pred_fallthru
      _
    // Predicated region
    $region46: #{tpu_custom_call.1} parent=1 // pred_check
      _
    $region47: #{tpu_custom_call.1} parent=1 // pred_check_branch
      %81 = sbr.rel (0) target = $region49
    $region48: #{tpu_custom_call.1} parent=1 // pred_region
      %82 = dma.done [#allocation6], 256
    $region49: #{tpu_custom_call.1} parent=1 // pred_fallthru
      _
    // Predicated region
    $region50: #{tpu_custom_call.1} parent=1 // pred_check
      _
    $region51: #{tpu_custom_call.1} parent=1 // pred_check_branch
      %84 = sbr.rel (0) target = $region53
    $region52: #{tpu_custom_call.1} parent=1 // pred_region
      %85 = dma.done [#allocation9], 8192
    $region53: #{tpu_custom_call.1} parent=1 // pred_fallthru
      _
    %v87 = vld [vmem:[%s0] sm:$0x1]
    %v88 = vld [vmem:[%s0 + $0x1] sm:$0x1]
    %v89 = vld [vmem:[%s0 + $0x2] sm:$0x1]
    %v90 = vld [vmem:[%s0 + $0x3] sm:$0x1]
    %v91 = vld [vmem:[#allocation5] sm:$0xff]
    %v92 = vld [vmem:[#allocation5 + $0x8] sm:$0xff]
    %v93 = vld [vmem:[#allocation5 + $0x10] sm:$0xff]
    %v94 = vld [vmem:[#allocation5 + $0x18] sm:$0xff]
    %v95 = vld [vmem:[#allocation5 + $0x20] sm:$0xff]
    %v96 = vld [vmem:[#allocation5 + $0x28] sm:$0xff]
    %v97 = vld [vmem:[#allocation5 + $0x30] sm:$0xff]
    %v98 = vld [vmem:[#allocation5 + $0x38] sm:$0xff]
    %v99 = vld [vmem:[#allocation3] sm:$0x1]
    %v100 = vld [vmem:[#allocation3 + $0x1] sm:$0x1]
    %v101 = vld [vmem:[#allocation3 + $0x2] sm:$0x1]
    %v102 = vld [vmem:[#allocation3 + $0x3] sm:$0x1]
    %v103 = vld [vmem:[#allocation7] sm:$0xff]
    %v104 = vld [vmem:[#allocation7 + $0x8] sm:$0xff]
    %v109 = vcombine.low %v99, %v100
    %v110 = vcombine.low %v101, %v102
    %v112 = vunpack.c.l.s4 1966171168
    %v113 = vunpack.c.0.s8 %v112
    %v114 = vlaneseq
    %v115 = vshrl.u32 %v114, 7
    %v116 = vsub.s32 %v113, %v115
    %v117 = vrot.slane %v109, %v116
    %v119 = vunpack.c.l.s4 1966171168
    %v120 = vunpack.c.0.s8 %v119
    %v121 = vlaneseq
    %v122 = vshrl.u32 %v121, 7
    %v123 = vsub.s32 %v120, %v122
    %v124 = vrot.slane %v110, %v123
    %v125 = vcombine.low %v117, %v124
    %v127 = vunpack.c.l.s4 1966171168
    %v128 = vunpack.c.0.s8 %v127
    %v129 = vlaneseq
    %v130 = vshrl.u32 %v129, 7
    %v131 = vsub.s32 %v128, %v130
    %v132 = vrot.slane %v125, %v131
    %v135 = vunpack.c.l.b16 %v103
    %v136 = vunpack.c.h.b16 %v103
    %v137 = vunpack.c.l.b16 %v104
    %v138 = vunpack.c.h.b16 %v104
    %v139 = vpack.c.b16 %v135, %v135
    %v140 = vpack.c.b16 %v136, %v136
    %v141 = vpack.c.b16 %v137, %v137
    %v142 = vpack.c.b16 %v138, %v138
    %vm143 = vcmask 64512
    %v145 = vsel %vm143, %v132, 0
    %vm147 = vcmask 1043456
    %v149 = vsel %vm147, %v139, 0
    %v152 = vsel %vm147, %v140, 0
    %v155 = vsel %vm147, %v141, 0
    %v158 = vsel %vm147, %v142, 0
    %160 = vmatprep.subr.bf16.mxu0 %v152
    %161 = vmatpush1.bf16.msra.mxu0 %v149
    %162 = vmatprep.subr.bf16.mxu0 0
    %163 = vmatpush1.bf16.msra.mxu0 0
    %164 = vmatprep.subr.bf16.mxu0 0
    %165 = vmatpush1.bf16.msra.mxu0 0
    %166 = vmatprep.subr.bf16.mxu0 0
    %167 = vmatpush1.bf16.msra.mxu0 0
    %168 = vmatprep.subr.bf16.mxu0 0
    %169 = vmatpush1.bf16.msra.mxu0 0
    %170 = vmatprep.subr.bf16.mxu0 0
    %171 = vmatpush1.bf16.msra.mxu0 0
    %172 = vmatprep.subr.bf16.mxu0 0
    %173 = vmatpush1.bf16.msra.mxu0 0
    %174 = vmatprep.subr.bf16.mxu0 0
    %175 = vmatpush1.bf16.msra.mxu0 0
    %176 = vmatprep.subr.bf16.mxu0 0
    %177 = vmatpush1.bf16.msra.mxu0 0
    %178 = vmatprep.subr.bf16.mxu0 0
    %179 = vmatpush1.bf16.msra.mxu0 0
    %180 = vmatprep.subr.bf16.mxu0 0
    %181 = vmatpush1.bf16.msra.mxu0 0
    %182 = vmatprep.subr.bf16.mxu0 0
    %183 = vmatpush1.bf16.msra.mxu0 0
    %184 = vmatprep.subr.bf16.mxu0 0
    %185 = vmatpush1.bf16.msra.mxu0 0
    %186 = vmatprep.subr.bf16.mxu0 0
    %187 = vmatpush1.bf16.msra.mxu0 0
    %188 = vmatprep.subr.bf16.mxu0 0
    %189 = vmatpush1.bf16.msra.mxu0 0
    %190 = vmatprep.subr.bf16.mxu0 0
    %191 = vmatpush1.bf16.msra.mxu0 0
    %192 = vmatprep.mubr.bf16.mxu0 0
    %193 = vmatmul.mubr.bf16.gmra.mrb[0].mxu0 %v145
    %v194 = vpop.f32.mrb[0].mxu0
    %v195 = vadd.f32 0.0, %v194
    %v196 = vpop.f32.mrb[0].mxu0
    %v197 = vadd.f32 0.0, %v196
    %v198 = vpop.f32.mrb[0].mxu0
    %v199 = vpop.f32.mrb[0].mxu0
    %200 = vdwg.mxu0
    %201 = vmatprep.subr.bf16.mxu0 %v158
    %202 = vmatpush1.bf16.msra.mxu0 %v155
    %203 = vmatprep.subr.bf16.mxu0 0
    %204 = vmatpush1.bf16.msra.mxu0 0
    %205 = vmatprep.subr.bf16.mxu0 0
    %206 = vmatpush1.bf16.msra.mxu0 0
    %207 = vmatprep.subr.bf16.mxu0 0
    %208 = vmatpush1.bf16.msra.mxu0 0
    %209 = vmatprep.subr.bf16.mxu0 0
    %210 = vmatpush1.bf16.msra.mxu0 0
    %211 = vmatprep.subr.bf16.mxu0 0
    %212 = vmatpush1.bf16.msra.mxu0 0
    %213 = vmatprep.subr.bf16.mxu0 0
    %214 = vmatpush1.bf16.msra.mxu0 0
    %215 = vmatprep.subr.bf16.mxu0 0
    %216 = vmatpush1.bf16.msra.mxu0 0
    %217 = vmatprep.subr.bf16.mxu0 0
    %218 = vmatpush1.bf16.msra.mxu0 0
    %219 = vmatprep.subr.bf16.mxu0 0
    %220 = vmatpush1.bf16.msra.mxu0 0
    %221 = vmatprep.subr.bf16.mxu0 0
    %222 = vmatpush1.bf16.msra.mxu0 0
    %223 = vmatprep.subr.bf16.mxu0 0
    %224 = vmatpush1.bf16.msra.mxu0 0
    %225 = vmatprep.subr.bf16.mxu0 0
    %226 = vmatpush1.bf16.msra.mxu0 0
    %227 = vmatprep.subr.bf16.mxu0 0
    %228 = vmatpush1.bf16.msra.mxu0 0
    %229 = vmatprep.subr.bf16.mxu0 0
    %230 = vmatpush1.bf16.msra.mxu0 0
    %231 = vmatprep.subr.bf16.mxu0 0
    %232 = vmatpush1.bf16.msra.mxu0 0
    %233 = vmatprep.mubr.bf16.mxu0 0
    %234 = vmatmul.mubr.bf16.gmra.mrb[0].mxu0 %v145
    %v235 = vpop.f32.mrb[0].mxu0
    %v236 = vadd.f32 0.0, %v235
    %v237 = vpop.f32.mrb[0].mxu0
    %v238 = vadd.f32 0.0, %v237
    %v239 = vpop.f32.mrb[0].mxu0
    %v240 = vpop.f32.mrb[0].mxu0
    %241 = vdwg.mxu0
    %v246 = vcombine.low %v87, %v88
    %v247 = vcombine.low %v89, %v90
    %v249 = vunpack.c.l.s4 1966171168
    %v250 = vunpack.c.0.s8 %v249
    %v251 = vlaneseq
    %v252 = vshrl.u32 %v251, 7
    %v253 = vsub.s32 %v250, %v252
    %v254 = vrot.slane %v246, %v253
    %v256 = vunpack.c.l.s4 1966171168
    %v257 = vunpack.c.0.s8 %v256
    %v258 = vlaneseq
    %v259 = vshrl.u32 %v258, 7
    %v260 = vsub.s32 %v257, %v259
    %v261 = vrot.slane %v247, %v260
    %v262 = vcombine.low %v254, %v261
    %v264 = vunpack.c.l.s4 1966171168
    %v265 = vunpack.c.0.s8 %v264
    %v266 = vlaneseq
    %v267 = vshrl.u32 %v266, 7
    %v268 = vsub.s32 %v265, %v267
    %v269 = vrot.slane %v262, %v268
    %v278 = vunpack.c.l.b16 %v91
    %v279 = vunpack.c.h.b16 %v91
    %v280 = vunpack.c.l.b16 %v92
    %v281 = vunpack.c.h.b16 %v92
    %v282 = vunpack.c.l.b16 %v93
    %v283 = vunpack.c.h.b16 %v93
    %v284 = vunpack.c.l.b16 %v94
    %v285 = vunpack.c.h.b16 %v94
    %v286 = vunpack.c.l.b16 %v95
    %v287 = vunpack.c.h.b16 %v95
    %v288 = vunpack.c.l.b16 %v96
    %v289 = vunpack.c.h.b16 %v96
    %v290 = vunpack.c.l.b16 %v97
    %v291 = vunpack.c.h.b16 %v97
    %v292 = vunpack.c.l.b16 %v98
    %v293 = vunpack.c.h.b16 %v98
    %v294 = vpack.c.b16 %v282, %v278
    %v295 = vpack.c.b16 %v283, %v279
    %v296 = vpack.c.b16 %v284, %v280
    %v297 = vpack.c.b16 %v285, %v281
    %v298 = vpack.c.b16 %v290, %v286
    %v299 = vpack.c.b16 %v291, %v287
    %v300 = vpack.c.b16 %v292, %v288
    %v301 = vpack.c.b16 %v293, %v289
    %vm310 = vcmask 261120
    %v312 = vsel %vm310, %v269, 0
    %314 = vmatprep.subr.bf16.mxu0 %v295
    %315 = vmatpush1.bf16.msra.mxu0 %v294
    %316 = vmatprep.subr.bf16.mxu0 %v299
    %317 = vmatpush1.bf16.msra.mxu0 %v298
    %318 = vmatprep.subr.bf16.mxu0 0
    %319 = vmatpush1.bf16.msra.mxu0 0
    %320 = vmatprep.subr.bf16.mxu0 0
    %321 = vmatpush1.bf16.msra.mxu0 0
    %322 = vmatprep.subr.bf16.mxu0 0
    %323 = vmatpush1.bf16.msra.mxu0 0
    %324 = vmatprep.subr.bf16.mxu0 0
    %325 = vmatpush1.bf16.msra.mxu0 0
    %326 = vmatprep.subr.bf16.mxu0 0
    %327 = vmatpush1.bf16.msra.mxu0 0
    %328 = vmatprep.subr.bf16.mxu0 0
    %329 = vmatpush1.bf16.msra.mxu0 0
    %330 = vmatprep.subr.bf16.mxu0 0
    %331 = vmatpush1.bf16.msra.mxu0 0
    %332 = vmatprep.subr.bf16.mxu0 0
    %333 = vmatpush1.bf16.msra.mxu0 0
    %334 = vmatprep.subr.bf16.mxu0 0
    %335 = vmatpush1.bf16.msra.mxu0 0
    %336 = vmatprep.subr.bf16.mxu0 0
    %337 = vmatpush1.bf16.msra.mxu0 0
    %338 = vmatprep.subr.bf16.mxu0 0
    %339 = vmatpush1.bf16.msra.mxu0 0
    %340 = vmatprep.subr.bf16.mxu0 0
    %341 = vmatpush1.bf16.msra.mxu0 0
    %342 = vmatprep.subr.bf16.mxu0 0
    %343 = vmatpush1.bf16.msra.mxu0 0
    %344 = vmatprep.subr.bf16.mxu0 0
    %345 = vmatpush1.bf16.msra.mxu0 0
    %346 = vmatprep.mubr.bf16.mxu0 0
    %347 = vmatmul.mubr.bf16.gmra.mrb[0].mxu0 %v312
    %v348 = vpop.f32.mrb[0].mxu0
    %v349 = vadd.f32 %v195, %v348
    %v350 = vpop.f32.mrb[0].mxu0
    %v351 = vadd.f32 %v197, %v350
    %v352 = vpop.f32.mrb[0].mxu0
    %v353 = vpop.f32.mrb[0].mxu0
    %354 = vdwg.mxu0
    %355 = vmatprep.subr.bf16.mxu0 %v297
    %356 = vmatpush1.bf16.msra.mxu0 %v296
    %357 = vmatprep.subr.bf16.mxu0 %v301
    %358 = vmatpush1.bf16.msra.mxu0 %v300
    %359 = vmatprep.subr.bf16.mxu0 0
    %360 = vmatpush1.bf16.msra.mxu0 0
    %361 = vmatprep.subr.bf16.mxu0 0
    %362 = vmatpush1.bf16.msra.mxu0 0
    %363 = vmatprep.subr.bf16.mxu0 0
    %364 = vmatpush1.bf16.msra.mxu0 0
    %365 = vmatprep.subr.bf16.mxu0 0
    %366 = vmatpush1.bf16.msra.mxu0 0
    %367 = vmatprep.subr.bf16.mxu0 0
    %368 = vmatpush1.bf16.msra.mxu0 0
    %369 = vmatprep.subr.bf16.mxu0 0
    %370 = vmatpush1.bf16.msra.mxu0 0
    %371 = vmatprep.subr.bf16.mxu0 0
    %372 = vmatpush1.bf16.msra.mxu0 0
    %373 = vmatprep.subr.bf16.mxu0 0
    %374 = vmatpush1.bf16.msra.mxu0 0
    %375 = vmatprep.subr.bf16.mxu0 0
    %376 = vmatpush1.bf16.msra.mxu0 0
    %377 = vmatprep.subr.bf16.mxu0 0
    %378 = vmatpush1.bf16.msra.mxu0 0
    %379 = vmatprep.subr.bf16.mxu0 0
    %380 = vmatpush1.bf16.msra.mxu0 0
    %381 = vmatprep.subr.bf16.mxu0 0
    %382 = vmatpush1.bf16.msra.mxu0 0
    %383 = vmatprep.subr.bf16.mxu0 0
    %384 = vmatpush1.bf16.msra.mxu0 0
    %385 = vmatprep.subr.bf16.mxu0 0
    %386 = vmatpush1.bf16.msra.mxu0 0
    %387 = vmatprep.mubr.bf16.mxu0 0
    %388 = vmatmul.mubr.bf16.gmra.mrb[0].mxu0 %v312
    %v389 = vpop.f32.mrb[0].mxu0
    %v390 = vadd.f32 %v236, %v389
    %v391 = vpop.f32.mrb[0].mxu0
    %v392 = vadd.f32 %v238, %v391
    %v393 = vpop.f32.mrb[0].mxu0
    %v394 = vpop.f32.mrb[0].mxu0
    %395 = vdwg.mxu0
    %v396 = vld [vmem:[%s4] sm:$0xf]
    %v398 = vlaneseq
    %v399 = vshrl.u32 %v398, 7
    %v400 = vsub.s32 0, %v399
    %v401 = vrot.slane %v396, %v400
    %v402 = vlaneseq
    %v403 = vshrl.u32 %v402, 7
    %v404 = vsub.s32 1, %v403
    %v405 = vrot.slane %v396, %v404
    %v406 = vlaneseq
    %v407 = vshrl.u32 %v406, 7
    %v408 = vsub.s32 2, %v407
    %v409 = vrot.slane %v396, %v408
    %v410 = vlaneseq
    %v411 = vshrl.u32 %v410, 7
    %v412 = vsub.s32 3, %v411
    %v413 = vrot.slane %v396, %v412
    %v418 = vadd.f32 %v349, %v401
    %v419 = vadd.f32 %v351, %v405
    %v420 = vadd.f32 %v390, %v409
    %v421 = vadd.f32 %v392, %v413
    %v422 = vmul.f32 %v418, 0.2
    %v423 = vmul.f32 %v419, 0.2
    %v424 = vmul.f32 %v420, 0.2
    %v425 = vmul.f32 %v421, 0.2
    %v426 = vmax.f32 %v418, %v422
    %v427 = vmax.f32 %v419, %v423
    %v428 = vmax.f32 %v420, %v424
    %v429 = vmax.f32 %v421, %v425
    %v430 = vpack.c.bf16 %v426, %v426
    %v431 = vpack.c.bf16 %v427, %v427
    %v432 = vpack.c.bf16 %v428, %v428
    %v433 = vpack.c.bf16 %v429, %v429
    %v434 = vld [vmem:[#allocation8] sm:$0xff]
    %v435 = vld [vmem:[#allocation8 + $0x8] sm:$0xff]
    %v436 = vld [vmem:[#allocation8 + $0x10] sm:$0xff]
    %v437 = vld [vmem:[#allocation8 + $0x18] sm:$0xff]
    %v438 = vld [vmem:[#allocation8 + $0x20] sm:$0xff]
    %v439 = vld [vmem:[#allocation8 + $0x28] sm:$0xff]
    %v440 = vld [vmem:[#allocation8 + $0x30] sm:$0xff]
    %v441 = vld [vmem:[#allocation8 + $0x38] sm:$0xff]
    %v442 = vld [vmem:[#allocation8 + $0x40] sm:$0xff]
    %v443 = vld [vmem:[#allocation8 + $0x48] sm:$0xff]
    %v444 = vld [vmem:[#allocation8 + $0x50] sm:$0xff]
    %v445 = vld [vmem:[#allocation8 + $0x58] sm:$0xff]
    %v446 = vld [vmem:[#allocation8 + $0x60] sm:$0xff]
    %v447 = vld [vmem:[#allocation8 + $0x68] sm:$0xff]
    %v448 = vld [vmem:[#allocation8 + $0x70] sm:$0xff]
    %v449 = vld [vmem:[#allocation8 + $0x78] sm:$0xff]
    %v450 = vld [vmem:[#allocation8 + $0x80] sm:$0xff]
    %v451 = vld [vmem:[#allocation8 + $0x88] sm:$0xff]
    %v452 = vld [vmem:[#allocation8 + $0x90] sm:$0xff]
    %v453 = vld [vmem:[#allocation8 + $0x98] sm:$0xff]
    %v454 = vld [vmem:[#allocation8 + $0xa0] sm:$0xff]
    %v455 = vld [vmem:[#allocation8 + $0xa8] sm:$0xff]
    %v456 = vld [vmem:[#allocation8 + $0xb0] sm:$0xff]
    %v457 = vld [vmem:[#allocation8 + $0xb8] sm:$0xff]
    %v458 = vld [vmem:[#allocation8 + $0xc0] sm:$0xff]
    %v459 = vld [vmem:[#allocation8 + $0xc8] sm:$0xff]
    %v460 = vld [vmem:[#allocation8 + $0xd0] sm:$0xff]
    %v461 = vld [vmem:[#allocation8 + $0xd8] sm:$0xff]
    %v462 = vld [vmem:[#allocation8 + $0xe0] sm:$0xff]
    %v463 = vld [vmem:[#allocation8 + $0xe8] sm:$0xff]
    %v464 = vld [vmem:[#allocation8 + $0xf0] sm:$0xff]
    %v465 = vld [vmem:[#allocation8 + $0xf8] sm:$0xff]
    %v466 = vld [vmem:[#allocation8 + $0x100] sm:$0xff]
    %v467 = vld [vmem:[#allocation8 + $0x108] sm:$0xff]
    %v468 = vld [vmem:[#allocation8 + $0x110] sm:$0xff]
    %v469 = vld [vmem:[#allocation8 + $0x118] sm:$0xff]
    %v470 = vld [vmem:[#allocation8 + $0x120] sm:$0xff]
    %v471 = vld [vmem:[#allocation8 + $0x128] sm:$0xff]
    %v472 = vld [vmem:[#allocation8 + $0x130] sm:$0xff]
    %v473 = vld [vmem:[#allocation8 + $0x138] sm:$0xff]
    %v474 = vld [vmem:[#allocation8 + $0x140] sm:$0xff]
    %v475 = vld [vmem:[#allocation8 + $0x148] sm:$0xff]
    %v476 = vld [vmem:[#allocation8 + $0x150] sm:$0xff]
    %v477 = vld [vmem:[#allocation8 + $0x158] sm:$0xff]
    %v478 = vld [vmem:[#allocation8 + $0x160] sm:$0xff]
    %v479 = vld [vmem:[#allocation8 + $0x168] sm:$0xff]
    %v480 = vld [vmem:[#allocation8 + $0x170] sm:$0xff]
    %v481 = vld [vmem:[#allocation8 + $0x178] sm:$0xff]
    %v482 = vld [vmem:[#allocation8 + $0x180] sm:$0xff]
    %v483 = vld [vmem:[#allocation8 + $0x188] sm:$0xff]
    %v484 = vld [vmem:[#allocation8 + $0x190] sm:$0xff]
    %v485 = vld [vmem:[#allocation8 + $0x198] sm:$0xff]
    %v486 = vld [vmem:[#allocation8 + $0x1a0] sm:$0xff]
    %v487 = vld [vmem:[#allocation8 + $0x1a8] sm:$0xff]
    %v488 = vld [vmem:[#allocation8 + $0x1b0] sm:$0xff]
    %v489 = vld [vmem:[#allocation8 + $0x1b8] sm:$0xff]
    %v490 = vld [vmem:[#allocation8 + $0x1c0] sm:$0xff]
    %v491 = vld [vmem:[#allocation8 + $0x1c8] sm:$0xff]
    %v492 = vld [vmem:[#allocation8 + $0x1d0] sm:$0xff]
    %v493 = vld [vmem:[#allocation8 + $0x1d8] sm:$0xff]
    %v494 = vld [vmem:[#allocation8 + $0x1e0] sm:$0xff]
    %v495 = vld [vmem:[#allocation8 + $0x1e8] sm:$0xff]
    %v496 = vld [vmem:[#allocation8 + $0x1f0] sm:$0xff]
    %v497 = vld [vmem:[#allocation8 + $0x1f8] sm:$0xff]
    %v498 = vld [vmem:[%s6] sm:$0x3]
    %v500 = vlaneseq
    %v501 = vshrl.u32 %v500, 7
    %v502 = vsub.s32 0, %v501
    %v503 = vrot.slane %v498, %v502
    %v504 = vlaneseq
    %v505 = vshrl.u32 %v504, 7
    %v506 = vsub.s32 1, %v505
    %v507 = vrot.slane %v498, %v506
    %v574 = vunpack.c.l.b16 %v434
    %v575 = vunpack.c.h.b16 %v434
    %v576 = vunpack.c.l.b16 %v435
    %v577 = vunpack.c.h.b16 %v435
    %v578 = vunpack.c.l.b16 %v436
    %v579 = vunpack.c.h.b16 %v436
    %v580 = vunpack.c.l.b16 %v437
    %v581 = vunpack.c.h.b16 %v437
    %v582 = vunpack.c.l.b16 %v438
    %v583 = vunpack.c.h.b16 %v438
    %v584 = vunpack.c.l.b16 %v439
    %v585 = vunpack.c.h.b16 %v439
    %v586 = vunpack.c.l.b16 %v440
    %v587 = vunpack.c.h.b16 %v440
    %v588 = vunpack.c.l.b16 %v441
    %v589 = vunpack.c.h.b16 %v441
    %v590 = vunpack.c.l.b16 %v442
    %v591 = vunpack.c.h.b16 %v442
    %v592 = vunpack.c.l.b16 %v443
    %v593 = vunpack.c.h.b16 %v443
    %v594 = vunpack.c.l.b16 %v444
    %v595 = vunpack.c.h.b16 %v444
    %v596 = vunpack.c.l.b16 %v445
    %v597 = vunpack.c.h.b16 %v445
    %v598 = vunpack.c.l.b16 %v446
    %v599 = vunpack.c.h.b16 %v446
    %v600 = vunpack.c.l.b16 %v447
    %v601 = vunpack.c.h.b16 %v447
    %v602 = vunpack.c.l.b16 %v448
    %v603 = vunpack.c.h.b16 %v448
    %v604 = vunpack.c.l.b16 %v449
    %v605 = vunpack.c.h.b16 %v449
    %v606 = vunpack.c.l.b16 %v450
    %v607 = vunpack.c.h.b16 %v450
    %v608 = vunpack.c.l.b16 %v451
    %v609 = vunpack.c.h.b16 %v451
    %v610 = vunpack.c.l.b16 %v452
    %v611 = vunpack.c.h.b16 %v452
    %v612 = vunpack.c.l.b16 %v453
    %v613 = vunpack.c.h.b16 %v453
    %v614 = vunpack.c.l.b16 %v454
    %v615 = vunpack.c.h.b16 %v454
    %v616 = vunpack.c.l.b16 %v455
    %v617 = vunpack.c.h.b16 %v455
    %v618 = vunpack.c.l.b16 %v456
    %v619 = vunpack.c.h.b16 %v456
    %v620 = vunpack.c.l.b16 %v457
    %v621 = vunpack.c.h.b16 %v457
    %v622 = vunpack.c.l.b16 %v458
    %v623 = vunpack.c.h.b16 %v458
    %v624 = vunpack.c.l.b16 %v459
    %v625 = vunpack.c.h.b16 %v459
    %v626 = vunpack.c.l.b16 %v460
    %v627 = vunpack.c.h.b16 %v460
    %v628 = vunpack.c.l.b16 %v461
    %v629 = vunpack.c.h.b16 %v461
    %v630 = vunpack.c.l.b16 %v462
    %v631 = vunpack.c.h.b16 %v462
    %v632 = vunpack.c.l.b16 %v463
    %v633 = vunpack.c.h.b16 %v463
    %v634 = vunpack.c.l.b16 %v464
    %v635 = vunpack.c.h.b16 %v464
    %v636 = vunpack.c.l.b16 %v465
    %v637 = vunpack.c.h.b16 %v465
    %v638 = vunpack.c.l.b16 %v466
    %v639 = vunpack.c.h.b16 %v466
    %v640 = vunpack.c.l.b16 %v467
    %v641 = vunpack.c.h.b16 %v467
    %v642 = vunpack.c.l.b16 %v468
    %v643 = vunpack.c.h.b16 %v468
    %v644 = vunpack.c.l.b16 %v469
    %v645 = vunpack.c.h.b16 %v469
    %v646 = vunpack.c.l.b16 %v470
    %v647 = vunpack.c.h.b16 %v470
    %v648 = vunpack.c.l.b16 %v471
    %v649 = vunpack.c.h.b16 %v471
    %v650 = vunpack.c.l.b16 %v472
    %v651 = vunpack.c.h.b16 %v472
    %v652 = vunpack.c.l.b16 %v473
    %v653 = vunpack.c.h.b16 %v473
    %v654 = vunpack.c.l.b16 %v474
    %v655 = vunpack.c.h.b16 %v474
    %v656 = vunpack.c.l.b16 %v475
    %v657 = vunpack.c.h.b16 %v475
    %v658 = vunpack.c.l.b16 %v476
    %v659 = vunpack.c.h.b16 %v476
    %v660 = vunpack.c.l.b16 %v477
    %v661 = vunpack.c.h.b16 %v477
    %v662 = vunpack.c.l.b16 %v478
    %v663 = vunpack.c.h.b16 %v478
    %v664 = vunpack.c.l.b16 %v479
    %v665 = vunpack.c.h.b16 %v479
    %v666 = vunpack.c.l.b16 %v480
    %v667 = vunpack.c.h.b16 %v480
    %v668 = vunpack.c.l.b16 %v481
    %v669 = vunpack.c.h.b16 %v481
    %v670 = vunpack.c.l.b16 %v482
    %v671 = vunpack.c.h.b16 %v482
    %v672 = vunpack.c.l.b16 %v483
    %v673 = vunpack.c.h.b16 %v483
    %v674 = vunpack.c.l.b16 %v484
    %v675 = vunpack.c.h.b16 %v484
    %v676 = vunpack.c.l.b16 %v485
    %v677 = vunpack.c.h.b16 %v485
    %v678 = vunpack.c.l.b16 %v486
    %v679 = vunpack.c.h.b16 %v486
    %v680 = vunpack.c.l.b16 %v487
    %v681 = vunpack.c.h.b16 %v487
    %v682 = vunpack.c.l.b16 %v488
    %v683 = vunpack.c.h.b16 %v488
    %v684 = vunpack.c.l.b16 %v489
    %v685 = vunpack.c.h.b16 %v489
    %v686 = vunpack.c.l.b16 %v490
    %v687 = vunpack.c.h.b16 %v490
    %v688 = vunpack.c.l.b16 %v491
    %v689 = vunpack.c.h.b16 %v491
    %v690 = vunpack.c.l.b16 %v492
    %v691 = vunpack.c.h.b16 %v492
    %v692 = vunpack.c.l.b16 %v493
    %v693 = vunpack.c.h.b16 %v493
    %v694 = vunpack.c.l.b16 %v494
    %v695 = vunpack.c.h.b16 %v494
    %v696 = vunpack.c.l.b16 %v495
    %v697 = vunpack.c.h.b16 %v495
    %v698 = vunpack.c.l.b16 %v496
    %v699 = vunpack.c.h.b16 %v496
    %v700 = vunpack.c.l.b16 %v497
    %v701 = vunpack.c.h.b16 %v497
    %v702 = vpack.c.b16 %v576, %v574
    %v703 = vpack.c.b16 %v577, %v575
    %v704 = vpack.c.b16 %v580, %v578
    %v705 = vpack.c.b16 %v581, %v579
    %v706 = vpack.c.b16 %v584, %v582
    %v707 = vpack.c.b16 %v585, %v583
    %v708 = vpack.c.b16 %v588, %v586
    %v709 = vpack.c.b16 %v589, %v587
    %v710 = vpack.c.b16 %v592, %v590
    %v711 = vpack.c.b16 %v593, %v591
    %v712 = vpack.c.b16 %v596, %v594
    %v713 = vpack.c.b16 %v597, %v595
    %v714 = vpack.c.b16 %v600, %v598
    %v715 = vpack.c.b16 %v601, %v599
    %v716 = vpack.c.b16 %v604, %v602
    %v717 = vpack.c.b16 %v605, %v603
    %v718 = vpack.c.b16 %v608, %v606
    %v719 = vpack.c.b16 %v609, %v607
    %v720 = vpack.c.b16 %v612, %v610
    %v721 = vpack.c.b16 %v613, %v611
    %v722 = vpack.c.b16 %v616, %v614
    %v723 = vpack.c.b16 %v617, %v615
    %v724 = vpack.c.b16 %v620, %v618
    %v725 = vpack.c.b16 %v621, %v619
    %v726 = vpack.c.b16 %v624, %v622
    %v727 = vpack.c.b16 %v625, %v623
    %v728 = vpack.c.b16 %v628, %v626
    %v729 = vpack.c.b16 %v629, %v627
    %v730 = vpack.c.b16 %v632, %v630
    %v731 = vpack.c.b16 %v633, %v631
    %v732 = vpack.c.b16 %v636, %v634
    %v733 = vpack.c.b16 %v637, %v635
    %v734 = vpack.c.b16 %v640, %v638
    %v735 = vpack.c.b16 %v641, %v639
    %v736 = vpack.c.b16 %v644, %v642
    %v737 = vpack.c.b16 %v645, %v643
    %v738 = vpack.c.b16 %v648, %v646
    %v739 = vpack.c.b16 %v649, %v647
    %v740 = vpack.c.b16 %v652, %v650
    %v741 = vpack.c.b16 %v653, %v651
    %v742 = vpack.c.b16 %v656, %v654
    %v743 = vpack.c.b16 %v657, %v655
    %v744 = vpack.c.b16 %v660, %v658
    %v745 = vpack.c.b16 %v661, %v659
    %v746 = vpack.c.b16 %v664, %v662
    %v747 = vpack.c.b16 %v665, %v663
    %v748 = vpack.c.b16 %v668, %v666
    %v749 = vpack.c.b16 %v669, %v667
    %v750 = vpack.c.b16 %v672, %v670
    %v751 = vpack.c.b16 %v673, %v671
    %v752 = vpack.c.b16 %v676, %v674
    %v753 = vpack.c.b16 %v677, %v675
    %v754 = vpack.c.b16 %v680, %v678
    %v755 = vpack.c.b16 %v681, %v679
    %v756 = vpack.c.b16 %v684, %v682
    %v757 = vpack.c.b16 %v685, %v683
    %v758 = vpack.c.b16 %v688, %v686
    %v759 = vpack.c.b16 %v689, %v687
    %v760 = vpack.c.b16 %v692, %v690
    %v761 = vpack.c.b16 %v693, %v691
    %v762 = vpack.c.b16 %v696, %v694
    %v763 = vpack.c.b16 %v697, %v695
    %v764 = vpack.c.b16 %v700, %v698
    %v765 = vpack.c.b16 %v701, %v699
    %830 = vmatprep.subr.bf16.mxu0 %v703
    %831 = vmatpush1.bf16.msra.mxu0 %v702
    %832 = vmatprep.subr.bf16.mxu0 %v705
    %833 = vmatpush1.bf16.msra.mxu0 %v704
    %834 = vmatprep.subr.bf16.mxu0 %v707
    %835 = vmatpush1.bf16.msra.mxu0 %v706
    %836 = vmatprep.subr.bf16.mxu0 %v709
    %837 = vmatpush1.bf16.msra.mxu0 %v708
    %838 = vmatprep.subr.bf16.mxu0 %v711
    %839 = vmatpush1.bf16.msra.mxu0 %v710
    %840 = vmatprep.subr.bf16.mxu0 %v713
    %841 = vmatpush1.bf16.msra.mxu0 %v712
    %842 = vmatprep.subr.bf16.mxu0 %v715
    %843 = vmatpush1.bf16.msra.mxu0 %v714
    %844 = vmatprep.subr.bf16.mxu0 %v717
    %845 = vmatpush1.bf16.msra.mxu0 %v716
    %846 = vmatprep.subr.bf16.mxu0 %v719
    %847 = vmatpush1.bf16.msra.mxu0 %v718
    %848 = vmatprep.subr.bf16.mxu0 %v721
    %849 = vmatpush1.bf16.msra.mxu0 %v720
    %850 = vmatprep.subr.bf16.mxu0 %v723
    %851 = vmatpush1.bf16.msra.mxu0 %v722
    %852 = vmatprep.subr.bf16.mxu0 %v725
    %853 = vmatpush1.bf16.msra.mxu0 %v724
    %854 = vmatprep.subr.bf16.mxu0 %v727
    %855 = vmatpush1.bf16.msra.mxu0 %v726
    %856 = vmatprep.subr.bf16.mxu0 %v729
    %857 = vmatpush1.bf16.msra.mxu0 %v728
    %858 = vmatprep.subr.bf16.mxu0 %v731
    %859 = vmatpush1.bf16.msra.mxu0 %v730
    %860 = vmatprep.subr.bf16.mxu0 %v733
    %861 = vmatpush1.bf16.msra.mxu0 %v732
    %862 = vmatprep.mubr.bf16.mxu0 %v431
    %863 = vmatmul.mubr.bf16.gmra.mrb[0].mxu0 %v430
    %v864 = vpop.f32.mrb[0].mxu0
    %v865 = vadd.f32 %v503, %v864
    %v866 = vpop.f32.mrb[0].mxu0
    %v867 = vadd.f32 %v507, %v866
    %v868 = vpop.f32.mrb[0].mxu0
    %v869 = vpop.f32.mrb[0].mxu0
    %870 = vdwg.mxu0
    %871 = vmatprep.subr.bf16.mxu0 %v735
    %872 = vmatpush1.bf16.msra.mxu0 %v734
    %873 = vmatprep.subr.bf16.mxu0 %v737
    %874 = vmatpush1.bf16.msra.mxu0 %v736
    %875 = vmatprep.subr.bf16.mxu0 %v739
    %876 = vmatpush1.bf16.msra.mxu0 %v738
    %877 = vmatprep.subr.bf16.mxu0 %v741
    %878 = vmatpush1.bf16.msra.mxu0 %v740
    %879 = vmatprep.subr.bf16.mxu0 %v743
    %880 = vmatpush1.bf16.msra.mxu0 %v742
    %881 = vmatprep.subr.bf16.mxu0 %v745
    %882 = vmatpush1.bf16.msra.mxu0 %v744
    %883 = vmatprep.subr.bf16.mxu0 %v747
    %884 = vmatpush1.bf16.msra.mxu0 %v746
    %885 = vmatprep.subr.bf16.mxu0 %v749
    %886 = vmatpush1.bf16.msra.mxu0 %v748
    %887 = vmatprep.subr.bf16.mxu0 %v751
    %888 = vmatpush1.bf16.msra.mxu0 %v750
    %889 = vmatprep.subr.bf16.mxu0 %v753
    %890 = vmatpush1.bf16.msra.mxu0 %v752
    %891 = vmatprep.subr.bf16.mxu0 %v755
    %892 = vmatpush1.bf16.msra.mxu0 %v754
    %893 = vmatprep.subr.bf16.mxu0 %v757
    %894 = vmatpush1.bf16.msra.mxu0 %v756
    %895 = vmatprep.subr.bf16.mxu0 %v759
    %896 = vmatpush1.bf16.msra.mxu0 %v758
    %897 = vmatprep.subr.bf16.mxu0 %v761
    %898 = vmatpush1.bf16.msra.mxu0 %v760
    %899 = vmatprep.subr.bf16.mxu0 %v763
    %900 = vmatpush1.bf16.msra.mxu0 %v762
    %901 = vmatprep.subr.bf16.mxu0 %v765
    %902 = vmatpush1.bf16.msra.mxu0 %v764
    %903 = vmatprep.mubr.bf16.mxu0 %v433
    %904 = vmatmul.mubr.bf16.gmra.mrb[0].mxu0 %v432
    %v905 = vpop.f32.mrb[0].mxu0
    %v906 = vadd.f32 %v865, %v905
    %v907 = vpop.f32.mrb[0].mxu0
    %v908 = vadd.f32 %v867, %v907
    %v909 = vpop.f32.mrb[0].mxu0
    %v910 = vpop.f32.mrb[0].mxu0
    %911 = vdwg.mxu0
    %v912 = vmul.f32 %v906, 0.2
    %v913 = vmul.f32 %v908, 0.2
    %v914 = vmax.f32 %v906, %v912
    %v915 = vmax.f32 %v908, %v913
    %v916 = vld [vmem:[%s7] sm:$0x3]
    %v918 = vlaneseq
    %v919 = vshrl.u32 %v918, 7
    %v920 = vsub.s32 0, %v919
    %v921 = vrot.slane %v916, %v920
    %v922 = vlaneseq
    %v923 = vshrl.u32 %v922, 7
    %v924 = vsub.s32 1, %v923
    %v925 = vrot.slane %v916, %v924
    %v928 = vmul.f32 %v914, %v921
    %v929 = vmul.f32 %v915, %v925
    %v930 = vadd.f32 %v928, %v929
    %931 = vadd.xlane.f32.xlu0 %v930
    %v932 = vpop.xlane.xlu0 %931
    %s933 = sld [smem:[#allocation2]]
    %v934 = vstv %s933
    %v935 = vadd.f32 %v932, %v934
    %v936 = vxor.u32 %v935, 2147483648
    %v937 = vmul.f32 %v936, 1.442695
    %v938 = vpow.pop %v937
    %v939 = vadd.f32 %v938, 1.0
    %v940 = vrcp.pop %v939
    %v941 = vmul.f32 1.0, %v940
    %vm942 = vcmask 7168
    %943 = vst.msk [vmem:[#allocation10] sm:$0xff] %vm942, %v941
    // Predicated region
    $region54: #{tpu_custom_call.1} parent=1 // pred_check
      _
    $region55: #{tpu_custom_call.1} parent=1 // pred_check_branch
      %945 = sbr.rel (0) target = $region57
    $region56: #{tpu_custom_call.1} parent=1 // pred_region
      // Predicated region
      $region58: #{tpu_custom_call.1} parent=56 // pred_check
        _
      $region59: #{tpu_custom_call.1} parent=56 // pred_check_branch
        %947 = sbr.rel (0) target = $region61
      $region60: #{tpu_custom_call.1} parent=56 // pred_region
        // Predicated region
        $region62: #{tpu_custom_call.1} parent=60 // pred_check
          _
        $region63: #{tpu_custom_call.1} parent=60 // pred_check_branch
          %949 = sbr.rel target = $region65
        $region64: #{tpu_custom_call.1} parent=60 // pred_region
          // Predicated region
          $region77: #{tpu_custom_call.1} parent=64 // pred_check
            _
          $region78: #{tpu_custom_call.1} parent=64 // pred_check_branch
            %964 = sbr.rel (0) target = $region80
          $region79: #{tpu_custom_call.1} parent=64 // pred_region
            loop: start=0, step=1, limit=1
            $region81: #{tpu_custom_call.1} parent=79 // loop_pre_header
              _
            $region82: #{tpu_custom_call.1} parent=79 // loop_header
              %s967 = sphi 0, %s971
              %p968 = scmp.ge.s32.totalorder %s967, 1
              %s972 = sphi [#allocation10], [#allocation10]
              %s973 = sphi %s9, %s9
            $region83: #{tpu_custom_call.1} parent=79 // loop_header_branch
              %970 = sbr.rel (%p968) target = $region87
            $region84: #{tpu_custom_call.1} parent=79 // loop_body
              %v974 = vld [vmem:[%s972] sm:$0x3]
              %975 = vst [vmem:[%s973] sm:$0x3] %v974
            $region85: #{tpu_custom_call.1} parent=79 // loop_footer
              %s971 = sadd.s32 1, %s967
            $region86: #{tpu_custom_call.1} parent=79 // loop_footer_branch
              %966 = sbr.rel target = $region82
            $region87: #{tpu_custom_call.1} parent=79 // loop_exit
              _
          $region80: #{tpu_custom_call.1} parent=64 // pred_fallthru
            _
        $region65: #{tpu_custom_call.1} parent=60 // pred_fallthru
          _
        // Predicated region
        $region66: #{tpu_custom_call.1} parent=60 // pred_check
          _
        $region67: #{tpu_custom_call.1} parent=60 // pred_check_branch
          %951 = sbr.rel (0) target = $region69
        $region68: #{tpu_custom_call.1} parent=60 // pred_region
          loop: start=0, step=1, limit=1
          $region70: #{tpu_custom_call.1} parent=68 // loop_pre_header
            _
          $region71: #{tpu_custom_call.1} parent=68 // loop_header
            %s954 = sphi 0, %s958
            %p955 = scmp.ge.s32.totalorder %s954, 1
            %s959 = sphi [#allocation10], [#allocation10]
            %s960 = sphi %s9, %s9
          $region72: #{tpu_custom_call.1} parent=68 // loop_header_branch
            %957 = sbr.rel (%p955) target = $region76
          $region73: #{tpu_custom_call.1} parent=68 // loop_body
            %v961 = vld [vmem:[%s959] sm:$0x3]
            %962 = vst [vmem:[%s960] sm:$0x3] %v961
          $region74: #{tpu_custom_call.1} parent=68 // loop_footer
            %s958 = sadd.s32 1, %s954
          $region75: #{tpu_custom_call.1} parent=68 // loop_footer_branch
            %953 = sbr.rel target = $region71
          $region76: #{tpu_custom_call.1} parent=68 // loop_exit
            _
        $region69: #{tpu_custom_call.1} parent=60 // pred_fallthru
          _
      $region61: #{tpu_custom_call.1} parent=56 // pred_fallthru
        _
      %976 = vnop
    $region57: #{tpu_custom_call.1} parent=1 // pred_fallthru
      _
    // Predicated region
    $region88: #{tpu_custom_call.1} parent=1 // pred_check
      _
    $region89: #{tpu_custom_call.1} parent=1 // pred_check_branch
      %978 = sbr.rel (0) target = $region91
    $region90: #{tpu_custom_call.1} parent=1 // pred_region
      _
    $region91: #{tpu_custom_call.1} parent=1 // pred_fallthru
      _
    %979 = vsyncpa [#allocation4], 1
    %980 = vsyncpa [#allocation6], 1
    %981 = vsyncpa [#allocation9], 1

</llo_original>
